<compile_context>
chip_gen: v5e
topology: v5e:2x2
jax: 0.10.0
libtpu: 0.0.40
codegen_flags: <defaults>
</compile_context>

<pallas_src>
import functools

import jax
import jax.numpy as jnp
from jax.experimental import pallas as pl
from jax.experimental.pallas import tpu as pltpu


def _cdiv(a, b):
    return -(-a // b)


def _shared_fc_kernel(lengths_ref, x_ref, w_ref, b_ref, o_ref, *,
                      n_batch, tile_n, compute_dtype, w_resident, neg_slope):
    # lengths_ref: SMEM (B,) int32 (scalar prefetch)
    # x_ref: (tile_b, tile_l, wD)
    # w_ref: (wD, H_pad) resident  OR  (wD, tile_n) tiled
    # b_ref: (1, H_pad) resident   OR  (1, tile_n) tiled   (always f32)
    # o_ref: (tile_b, tile_l, tile_n)
    bb = pl.program_id(0)      # batch-tile index
    li = pl.program_id(1)      # sequence-tile index
    tb, tl, _ = x_ref.shape

    if w_resident:
        off = pl.multiple_of(pl.program_id(2) * tile_n, tile_n)
        w_tile = w_ref[:, pl.ds(off, tile_n)]
        b_tile = b_ref[:, pl.ds(off, tile_n)]
    else:
        w_tile = w_ref[...]
        b_tile = b_ref[...]
    if compute_dtype is not None and w_tile.dtype != compute_dtype:
        w_tile = w_tile.astype(compute_dtype)
    b_tile = b_tile.astype(jnp.float32)

    # Per-row sequence position (>=2D iota, as TPU requires).
    l_iota = jax.lax.broadcasted_iota(jnp.int32, (tl, 1), 0) + li * tl

    # Static unroll over folded batches (tb == 1 for the large-L path).
    for db in range(tb):
        x2 = x_ref[db]                                   # (tl, wD)
        if compute_dtype is not None and x2.dtype != compute_dtype:
            x2 = x2.astype(compute_dtype)                # cast in-kernel (no HBM pass)
        h = jnp.dot(x2, w_tile, preferred_element_type=jnp.float32)
        h = h + b_tile
        # LeakyReLU, default negative_slope = 0.01
        h = jnp.where(h > 0, h, neg_slope * h)
        # Row-validity mask from scalar-prefetched lengths (also zeroes
        # overhang rows; clamp keeps boundary batch blocks in-bounds in SMEM).
        ln = lengths_ref[jnp.minimum(bb * tb + db, n_batch - 1)]
        valid = l_iota < ln
        # Keep the mask on the store path (overhang x rows may be garbage).
        o_ref[db] = jnp.where(valid, h, 0.0).astype(o_ref.dtype)


@functools.partial(
    jax.jit,
    static_argnames=("compute_dtype", "out_dtype", "max_tile_l", "max_tile_n",
                     "w_resident_max_bytes"))
def shared_fc_forward(text, text_lengths, w, b, *,
                      compute_dtype=jnp.bfloat16,
                      out_dtype=None,
                      max_tile_l=512, max_tile_n=512,
                      w_resident_max_bytes=16 * 1024 * 1024):
    """Mirror of SharedFC.forward.

    text: (B, L, wD) float, text_lengths: (B,) int, w: (wD, H) (transposed
    PyTorch Linear weight), b: (1, H) or (H,).
    returns (fc_feat (B, L, H), mask (B, L))
    """
    B, L, wD = text.shape
    H = w.shape[1]
    out_dtype = text.dtype if out_dtype is None else out_dtype
    text_lengths = jnp.asarray(text_lengths, jnp.int32)

    # mask = arange(L) < lengths  (returned to the caller, like the module)
    mask = (jnp.arange(L)[None, :] < text_lengths[:, None]).astype(text.dtype)

    # --- sequence / batch tiling -------------------------------------------
    if L <= max_tile_l:
        tile_l = L                                    # full dim (any L allowed)
    else:
        tile_l = max(8, (max_tile_l // 8) * 8)        # default 512 (256-aligned)
    n_l = _cdiv(L, tile_l)
    # Fold batches when L is small so each grid step carries ~max_tile_l rows.
    tile_b = min(B, max(1, max_tile_l // max(tile_l, 1))) if n_l == 1 else 1
    n_b = _cdiv(B, tile_b)

    # --- hidden tiling (lane-dense, never larger than H) --------------------
    if H <= max_tile_n:
        tile_n = H                                    # full dim
    else:
        tile_n = max(128, (max_tile_n // 128) * 128)  # multiple of 128
    n_h = _cdiv(H, tile_n)
    H_pad = n_h * tile_n

    # --- weights / bias (small tensors: casting / padding them is cheap) ----
    w_in = w
    if compute_dtype is not None and w_in.dtype != compute_dtype:
        w_in = w_in.astype(compute_dtype)
    b_in = jnp.asarray(b, jnp.float32).reshape(1, -1)

    w_itemsize = jnp.dtype(w_in.dtype).itemsize
    w_resident = (n_h > 1) and (wD * H_pad * w_itemsize <= w_resident_max_bytes)
    if w_resident and H_pad != H:
        w_in = jnp.pad(w_in, ((0, 0), (0, H_pad - H)))
        b_in = jnp.pad(b_in, ((0, 0), (0, H_pad - H)))

    # --- BlockSpecs ----------------------------------------------------------
    x_spec = pl.BlockSpec((tile_b, tile_l, wD), lambda bb, li, j, lens: (bb, li, 0))
    out_spec = pl.BlockSpec((tile_b, tile_l, tile_n), lambda bb, li, j, lens: (bb, li, j))
    if w_resident:
        # W resident in VMEM: DMA'd once (constant block index), sliced in-kernel.
        w_spec = pl.BlockSpec((wD, H_pad), lambda bb, li, j, lens: (0, 0))
        b_spec = pl.BlockSpec((1, H_pad), lambda bb, li, j, lens: (0, 0))
    elif n_h > 1:
        # Tiled fallback (large W): deeper pipelining hides short W DMAs.
        w_spec = pl.BlockSpec((wD, tile_n), lambda bb, li, j, lens: (0, j),
                              pipeline_mode=pl.Buffered(3))
        b_spec = pl.BlockSpec((1, tile_n), lambda bb, li, j, lens: (0, j))
    else:
        w_spec = pl.BlockSpec((wD, tile_n), lambda bb, li, j, lens: (0, j))
        b_spec = pl.BlockSpec((1, tile_n), lambda bb, li, j, lens: (0, j))

    # --- VMEM budget (double-buffered x/out, W resident or 3-buffered) ------
    x_isize = jnp.dtype(text.dtype).itemsize
    o_isize = jnp.dtype(out_dtype).itemsize
    needed = (2 * tile_b * tile_l * wD * x_isize
              + 2 * tile_b * tile_l * tile_n * o_isize
              + (2 * wD * H_pad if w_resident else 3 * wD * tile_n) * w_itemsize
              + 4 * H_pad * 4)
    vmem_limit = int(min(64 << 20, max(32 << 20, needed + (8 << 20))))

    cost = pl.CostEstimate(
        flops=2 * B * L * wD * H,
        transcendentals=0,
        bytes_accessed=int(B * L * wD * x_isize + wD * H * w_itemsize
                           + H * 4 + B * L * H * o_isize))

    kernel = functools.partial(
        _shared_fc_kernel, n_batch=B, tile_n=tile_n, compute_dtype=compute_dtype,
        w_resident=w_resident, neg_slope=0.01)

    fc_feat = pl.pallas_call(
        kernel,
        out_shape=jax.ShapeDtypeStruct((B, L, H), out_dtype),
        grid_spec=pltpu.PrefetchScalarGridSpec(
            num_scalar_prefetch=1,
            grid=(n_b, n_l, n_h),
            in_specs=[x_spec, w_spec, b_spec],
            out_specs=out_spec),
        compiler_params=pltpu.CompilerParams(
            dimension_semantics=("parallel", "parallel", "parallel"),
            vmem_limit_bytes=vmem_limit),
        cost_estimate=cost,
    )(text_lengths, text, w_in, b_in)
    return fc_feat, mask


if __name__ == "__main__":
    key = jax.random.PRNGKey(0)
    k1, k2, k3, k4 = jax.random.split(key, 4)

    def ref_forward(text, lengths, w, b):
        L = text.shape[1]
        mask = (jnp.arange(L)[None, :] < lengths[:, None]).astype(text.dtype)
        h = jnp.einsum("blw,wh->blh", text, w,
                       preferred_element_type=jnp.float32) + b.reshape(1, 1, -1)
        h = jnp.where(h > 0, h, 0.01 * h)
        return (h * mask[..., None]).astype(text.dtype), mask

    # ---- test 1: module-sized shapes (B=2, L=8, word_dim=32, hidden=32) ----
    B, L, word_dim, hidden_dim = 2, 8, 32, 32
    text = jax.random.normal(k1, (B, L, word_dim), dtype=jnp.float32)
    text_lengths = jnp.array([8, 5], dtype=jnp.int32)
    # PyTorch stores weight as (hidden_dim, word_dim); we keep the transpose.
    w = (jax.random.uniform(k2, (word_dim, hidden_dim), jnp.float32) - 0.5) * 0.2
    b = (jax.random.uniform(k3, (1, hidden_dim), jnp.float32) - 0.5) * 0.2

    ref_out, ref_mask = ref_forward(text, text_lengths, w, b)

    # f32 compute path (tight correctness check).
    fc32, mask = shared_fc_forward(text, text_lengths, w, b,
                                   compute_dtype=jnp.float32)
    jax.block_until_ready((fc32, mask))
    assert fc32.shape == (B, L, hidden_dim) and mask.shape == (B, L)
    assert jnp.allclose(mask, ref_mask)
    assert jnp.allclose(fc32, ref_out, atol=1e-5, rtol=1e-5)

    # Default bf16 compute path (perf-oriented), checked vs bf16-cast reference.
    fcbf, _ = shared_fc_forward(text, text_lengths, w, b)
    jax.block_until_ready(fcbf)
    refbf, _ = ref_forward(text.astype(jnp.bfloat16).astype(jnp.float32),
                           text_lengths,
                           w.astype(jnp.bfloat16).astype(jnp.float32), b)
    assert jnp.allclose(fcbf, refbf, atol=2e-2, rtol=2e-2)

    # ---- test 2: irregular shapes exercising resident-W, non-divisible grid,
    #              boundary (overhang) blocks on both L and H --------------
    B2, L2, wD2, H2 = 3, 37, 48, 200
    text2 = jax.random.normal(k4, (B2, L2, wD2), dtype=jnp.float32)
    lengths2 = jnp.array([37, 20, 5], dtype=jnp.int32)
    w2 = (jax.random.uniform(k2, (wD2, H2), jnp.float32) - 0.5) * 0.2
    b2 = (jax.random.uniform(k3, (1, H2), jnp.float32) - 0.5) * 0.2

    out2, mask2 = shared_fc_forward(text2, lengths2, w2, b2,
                                    compute_dtype=jnp.float32,
                                    max_tile_l=16, max_tile_n=128)
    jax.block_until_ready((out2, mask2))
    ref2, refm2 = ref_forward(text2, lengths2, w2, b2)
    assert out2.shape == (B2, L2, H2)
    assert jnp.allclose(mask2, refm2)
    assert jnp.allclose(out2, ref2, atol=1e-4, rtol=1e-4)

    print("KERNEL_OK")
</pallas_src>

<mosaic_0001>
module attributes {stable_mosaic.version = 11 : i64} {
  func.func @_shared_fc_kernel(%arg0: i32, %arg1: i32, %arg2: i32, %arg3: memref<2xi32, #tpu.memory_space<smem>>, %arg4: memref<2x8x32xf32, #tpu.memory_space<vmem>>, %arg5: memref<32x32xf32, #tpu.memory_space<vmem>>, %arg6: memref<1x32xf32, #tpu.memory_space<vmem>>, %arg7: memref<2x8x32xf32, #tpu.memory_space<vmem>>) attributes {dimension_semantics = [#tpu.dimension_semantics<parallel>, #tpu.dimension_semantics<parallel>, #tpu.dimension_semantics<parallel>], iteration_bounds = array<i64: 1, 1, 1>, scalar_prefetch = 1 : i64, scratch_operands = 0 : i64, tpu.core_type = #tpu.core_type<tc>, window_params = [{transform_indices = @transform_0, window_bounds = array<i64: 2, 8, 32>}, {transform_indices = @transform_1, window_bounds = array<i64: 32, 32>}, {transform_indices = @transform_2, window_bounds = array<i64: 1, 32>}, {transform_indices = @transform_3, window_bounds = array<i64: 2, 8, 32>}]} {
    %c0 = arith.constant 0 : index
    %c0_0 = arith.constant 0 : index
    %0 = vector.load %arg5[%c0, %c0_0] : memref<32x32xf32, #tpu.memory_space<vmem>>, vector<32x32xf32>
    %c0_1 = arith.constant 0 : index
    %c0_2 = arith.constant 0 : index
    %1 = vector.load %arg6[%c0_1, %c0_2] : memref<1x32xf32, #tpu.memory_space<vmem>>, vector<1x32xf32>
    %2 = tpu.iota {dimensions = array<i32: 0>} : vector<8x1xi32>
    %c8_i32 = arith.constant 8 : i32
    %3 = arith.muli %arg1, %c8_i32 : i32
    %4 = vector.broadcast %3 : i32 to vector<8x1xi32>
    %5 = arith.addi %2, %4 : vector<8x1xi32>
    %c0_3 = arith.constant 0 : index
    %c0_4 = arith.constant 0 : index
    %c0_5 = arith.constant 0 : index
    %6 = vector.load %arg4[%c0_3, %c0_4, %c0_5] : memref<2x8x32xf32, #tpu.memory_space<vmem>>, vector<1x8x32xf32>
    %7 = vector.shape_cast %6 : vector<1x8x32xf32> to vector<8x32xf32>
    %cst = arith.constant dense<0.000000e+00> : vector<8x32xf32>
    %8 = tpu.matmul %7, %0, %cst {dimension_numbers = #tpu.dot_dimension_numbers<[1], [0], [0], [1], [0, 0, 1, 1], [], []>} : vector<8x32xf32>, vector<32x32xf32>, vector<8x32xf32> -> vector<8x32xf32>
    %9 = vector.broadcast %1 : vector<1x32xf32> to vector<8x32xf32>
    %10 = arith.addf %8, %9 : vector<8x32xf32>
    %cst_6 = arith.constant 0.000000e+00 : f32
    %11 = vector.broadcast %cst_6 : f32 to vector<8x32xf32>
    %12 = arith.cmpf ogt, %10, %11 : vector<8x32xf32>
    %cst_7 = arith.constant 0.00999999977 : f32
    %13 = vector.broadcast %cst_7 : f32 to vector<8x32xf32>
    %14 = arith.mulf %13, %10 : vector<8x32xf32>
    %15 = arith.select %12, %10, %14 : vector<8x32xi1>, vector<8x32xf32>
    %c2_i32 = arith.constant 2 : i32
    %16 = arith.muli %arg0, %c2_i32 : i32
    %c0_i32 = arith.constant 0 : i32
    %17 = arith.addi %16, %c0_i32 : i32
    %c1_i32 = arith.constant 1 : i32
    %18 = arith.minsi %17, %c1_i32 : i32
    %19 = arith.index_cast %18 : i32 to index
    %20 = memref.load %arg3[%19] : memref<2xi32, #tpu.memory_space<smem>>
    %21 = vector.broadcast %20 : i32 to vector<8x1xi32>
    %22 = arith.cmpi slt, %5, %21 : vector<8x1xi32>
    %cst_8 = arith.constant 0.000000e+00 : f32
    %23 = vector.shape_cast %22 : vector<8x1xi1> to vector<8x1xi1>
    %24 = vector.broadcast %23 : vector<8x1xi1> to vector<8x32xi1>
    %25 = vector.broadcast %cst_8 : f32 to vector<8x32xf32>
    %26 = arith.select %24, %15, %25 : vector<8x32xi1>, vector<8x32xf32>
    %c0_9 = arith.constant 0 : index
    %c0_10 = arith.constant 0 : index
    %c0_11 = arith.constant 0 : index
    %27 = vector.load %arg7[%c0_9, %c0_10, %c0_11] : memref<2x8x32xf32, #tpu.memory_space<vmem>>, vector<1x8x32xf32>
    %28 = vector.shape_cast %27 : vector<1x8x32xf32> to vector<8x32xf32>
    %29 = vector.shape_cast %26 : vector<8x32xf32> to vector<1x8x32xf32>
    tpu.vector_store %arg7[%c0_9, %c0_10, %c0_11], %29 {strides = array<i32>} : memref<2x8x32xf32, #tpu.memory_space<vmem>>, vector<1x8x32xf32>,
    %c1 = arith.constant 1 : index
    %c0_12 = arith.constant 0 : index
    %c0_13 = arith.constant 0 : index
    %30 = vector.load %arg4[%c1, %c0_12, %c0_13] : memref<2x8x32xf32, #tpu.memory_space<vmem>>, vector<1x8x32xf32>
    %31 = vector.shape_cast %30 : vector<1x8x32xf32> to vector<8x32xf32>
    %cst_14 = arith.constant dense<0.000000e+00> : vector<8x32xf32>
    %32 = tpu.matmul %31, %0, %cst_14 {dimension_numbers = #tpu.dot_dimension_numbers<[1], [0], [0], [1], [0, 0, 1, 1], [], []>} : vector<8x32xf32>, vector<32x32xf32>, vector<8x32xf32> -> vector<8x32xf32>
    %33 = vector.broadcast %1 : vector<1x32xf32> to vector<8x32xf32>
    %34 = arith.addf %32, %33 : vector<8x32xf32>
    %cst_15 = arith.constant 0.000000e+00 : f32
    %35 = vector.broadcast %cst_15 : f32 to vector<8x32xf32>
    %36 = arith.cmpf ogt, %34, %35 : vector<8x32xf32>
    %cst_16 = arith.constant 0.00999999977 : f32
    %37 = vector.broadcast %cst_16 : f32 to vector<8x32xf32>
    %38 = arith.mulf %37, %34 : vector<8x32xf32>
    %39 = arith.select %36, %34, %38 : vector<8x32xi1>, vector<8x32xf32>
    %c2_i32_17 = arith.constant 2 : i32
    %40 = arith.muli %arg0, %c2_i32_17 : i32
    %c1_i32_18 = arith.constant 1 : i32
    %41 = arith.addi %40, %c1_i32_18 : i32
    %c1_i32_19 = arith.constant 1 : i32
    %42 = arith.minsi %41, %c1_i32_19 : i32
    %43 = arith.index_cast %42 : i32 to index
    %44 = memref.load %arg3[%43] : memref<2xi32, #tpu.memory_space<smem>>
    %45 = vector.broadcast %44 : i32 to vector<8x1xi32>
    %46 = arith.cmpi slt, %5, %45 : vector<8x1xi32>
    %cst_20 = arith.constant 0.000000e+00 : f32
    %47 = vector.shape_cast %46 : vector<8x1xi1> to vector<8x1xi1>
    %48 = vector.broadcast %47 : vector<8x1xi1> to vector<8x32xi1>
    %49 = vector.broadcast %cst_20 : f32 to vector<8x32xf32>
    %50 = arith.select %48, %39, %49 : vector<8x32xi1>, vector<8x32xf32>
    %c1_21 = arith.constant 1 : index
    %c0_22 = arith.constant 0 : index
    %c0_23 = arith.constant 0 : index
    %51 = vector.load %arg7[%c1_21, %c0_22, %c0_23] : memref<2x8x32xf32, #tpu.memory_space<vmem>>, vector<1x8x32xf32>
    %52 = vector.shape_cast %51 : vector<1x8x32xf32> to vector<8x32xf32>
    %53 = vector.shape_cast %50 : vector<8x32xf32> to vector<1x8x32xf32>
    tpu.vector_store %arg7[%c1_21, %c0_22, %c0_23], %53 {strides = array<i32>} : memref<2x8x32xf32, #tpu.memory_space<vmem>>, vector<1x8x32xf32>,
    return
  }
  func.func @transform_0(%arg0: i32, %arg1: i32, %arg2: i32, %arg3: memref<2xi32, #tpu.memory_space<smem>>) -> (i32, i32, i32) {
    %c0_i32 = arith.constant 0 : i32
    %c0_i32_0 = arith.constant 0 : i32
    return %arg0, %arg1, %c0_i32 : i32, i32, i32
  }
  func.func @transform_1(%arg0: i32, %arg1: i32, %arg2: i32, %arg3: memref<2xi32, #tpu.memory_space<smem>>) -> (i32, i32) {
    %c0_i32 = arith.constant 0 : i32
    %c0_i32_0 = arith.constant 0 : i32
    return %c0_i32, %arg2 : i32, i32
  }
  func.func @transform_2(%arg0: i32, %arg1: i32, %arg2: i32, %arg3: memref<2xi32, #tpu.memory_space<smem>>) -> (i32, i32) {
    %c0_i32 = arith.constant 0 : i32
    %c0_i32_0 = arith.constant 0 : i32
    return %c0_i32, %arg2 : i32, i32
  }
  func.func @transform_3(%arg0: i32, %arg1: i32, %arg2: i32, %arg3: memref<2xi32, #tpu.memory_space<smem>>) -> (i32, i32, i32) {
    %c0_i32 = arith.constant 0 : i32
    return %arg0, %arg1, %arg2 : i32, i32, i32
  }
}

</mosaic_0001>

<llo_original>
// kernel: shared_fc_forward.1
$region0: #{shared_fc_forward.1}
  #allocation0 [shape = 'u32[]', space=smem, size = 0x4, offset = 0x4, fixed_abs, tag = 'smem constant byte address 0x4 - core index']
  #allocation1 [shape = 'u32[72,128]{1,0:T(1,128)}', space=vmem, size = 0x9000, scoped, tag = 'internal scratch']
  #allocation2 [shape = 's32[1]{0}', space=sflag, size = 0x4, scoped, tag = 'scoped memory for shared_fc_forward.1']
  #allocation3 [shape = 'u8[512]{0}', space=smem, size = 0x200, scoped, tag = 'prefetched SMEM operand 0']
  %s0 = inlined_call_operand.vmem [shape: s32[2], index: 0, kind: input, shape index: {}]
  %s1 = inlined_call_operand.hbm [shape: f32[2,8,32], index: 1, kind: input, shape index: {}]
  %s2 = inlined_call_operand.hbm [shape: f32[32,32], index: 2, kind: input, shape index: {}]
  %s3 = inlined_call_operand.vmem [shape: f32[1,32], index: 3, kind: input, shape index: {}]
  %s4 = inlined_call_operand.hbm [shape: f32[2,8,32], index: 4, kind: output, shape index: {}]
  %s5 = sld [smem:[#allocation0]]
  $region30: #{shared_fc_forward.1} parent=0
    _
  %s7 = ssub.s32 1, %s5
  %s8 = scalar_select 0, %s7, %s5
  %s10 = sshll.u32 %s0, 4
  %s11 = int_to_ptr.vmem [resolvable:$true] %s10
  %13 = dma.vmem_to_smem %s11, 16, [#allocation3], [#allocation2]
  %15 = dma.done [#allocation2], 16
  %16 = sfence
  $region1: #{shared_fc_forward.1} parent=0
    #allocation4 [shape = 'u8[8192]{0}', space=vmem, size = 0x2000, scoped, tag = 'input window, operand 1, single buffered']
    #allocation5 [shape = 's32[1]{0}', space=sflag, size = 0x4, scoped, tag = 'scoped memory for shared_fc_forward.1']
    #allocation6 [shape = 's32[1]{0}', space=sflag, size = 0x4, scoped, tag = 'scoped memory for shared_fc_forward.1']
    #allocation7 [shape = 'u8[16384]{0}', space=vmem, size = 0x4000, scoped, tag = 'input window, operand 2, single buffered']
    #allocation8 [shape = 's32[1]{0}', space=sflag, size = 0x4, scoped, tag = 'scoped memory for shared_fc_forward.1']
    #allocation9 [shape = 'u8[8192]{0}', space=vmem, size = 0x2000, scoped, tag = 'output window, operand 0, single buffered']
    %17 = vsyncpa [#allocation5], 0
    %18 = vsyncpa [#allocation8], 0
    %19 = vsyncpa [#allocation6], 0
    // Predicated region
    $region2: #{shared_fc_forward.1} parent=1 // pred_check
      _
    $region3: #{shared_fc_forward.1} parent=1 // pred_check_branch
      %21 = sbr.rel (0) target = $region5
    $region4: #{shared_fc_forward.1} parent=1 // pred_region
      %23 = vsyncadd [#allocation5], 0
      %s24 = sshll.u32 %s1, 4
      %s25 = int_to_ptr.hbm [resolvable:$true] %s24
      %s26 = sshll.u32 [#allocation4], 4
      %s27 = int_to_ptr.vmem [resolvable:$true] %s26
      %32 = dma.hbm_to_vmem [thread:$0]  %s25, 256, %s27, [#allocation5], 128, 128, 8
    $region5: #{shared_fc_forward.1} parent=1 // pred_fallthru
      _
    // Predicated region
    $region6: #{shared_fc_forward.1} parent=1 // pred_check
      _
    $region7: #{shared_fc_forward.1} parent=1 // pred_check_branch
      %34 = sbr.rel (0) target = $region9
    $region8: #{shared_fc_forward.1} parent=1 // pred_region
      %36 = vsyncadd [#allocation8], 0
      %s37 = sshll.u32 %s2, 4
      %s38 = int_to_ptr.hbm [resolvable:$true] %s37
      %s39 = sshll.u32 [#allocation7], 4
      %s40 = int_to_ptr.vmem [resolvable:$true] %s39
      %45 = dma.hbm_to_vmem [thread:$0]  %s38, 512, %s40, [#allocation8], 128, 128, 8
    $region9: #{shared_fc_forward.1} parent=1 // pred_fallthru
      _
    // Predicated region
    $region10: #{shared_fc_forward.1} parent=1 // pred_check
      _
    $region11: #{shared_fc_forward.1} parent=1 // pred_check_branch
      %47 = sbr.rel (0) target = $region13
    $region12: #{shared_fc_forward.1} parent=1 // pred_region
      _
    $region13: #{shared_fc_forward.1} parent=1 // pred_fallthru
      _
    // Predicated region
    $region14: #{shared_fc_forward.1} parent=1 // pred_check
      _
    $region15: #{shared_fc_forward.1} parent=1 // pred_check_branch
      %49 = sbr.rel (0) target = $region17
    $region16: #{shared_fc_forward.1} parent=1 // pred_region
      %51 = dma.done [#allocation5], 256
    $region17: #{shared_fc_forward.1} parent=1 // pred_fallthru
      _
    // Predicated region
    $region18: #{shared_fc_forward.1} parent=1 // pred_check
      _
    $region19: #{shared_fc_forward.1} parent=1 // pred_check_branch
      %53 = sbr.rel (0) target = $region21
    $region20: #{shared_fc_forward.1} parent=1 // pred_region
      %55 = dma.done [#allocation8], 512
    $region21: #{shared_fc_forward.1} parent=1 // pred_fallthru
      _
    %v56 = vld [vmem:[#allocation7] sm:$0xff]
    %v57 = vld [vmem:[#allocation7 + $0x8] sm:$0xff]
    %v58 = vld [vmem:[#allocation7 + $0x10] sm:$0xff]
    %v59 = vld [vmem:[#allocation7 + $0x18] sm:$0xff]
    %v60 = vld [vmem:[%s3] sm:$0x1]
    %v61 = vlaneseq
    %v62 = vshrl.u32 %v61, 7
    %s63 = smul.u32 0, 8
    %v64 = vstv %s63
    %v65 = vadd.s32 %v62, %v64
    %v66 = vld [vmem:[#allocation4] sm:$0xff]
    %v68 = vperm.slane %v60, 0
    %vm70 = vcmask 261120
    %v72 = vsel %vm70, %v66, 0
    %74 = vmatpush.msra.mxu0 0.0
    %75 = vmatpush.msra.mxu0 0.0
    %76 = vmatpush.msra.mxu0 0.0
    %77 = vmatpush.msra.mxu0 0.0
    %78 = vmatpush.msra.mxu0 0.0
    %79 = vmatpush.msra.mxu0 0.0
    %80 = vmatpush.msra.mxu0 0.0
    %81 = vmatpush.msra.mxu0 0.0
    %82 = vmatpush.msra.mxu0 0.0
    %83 = vmatpush.msra.mxu0 0.0
    %84 = vmatpush.msra.mxu0 0.0
    %85 = vmatpush.msra.mxu0 0.0
    %86 = vmatpush.msra.mxu0 %v59
    %87 = vmatpush.msra.mxu0 %v58
    %88 = vmatpush.msra.mxu0 %v57
    %89 = vmatpush.msra.mxu0 %v56
    %90 = vmatmul.f32.gmra.mxu0 %v72
    %v91 = vpop.f32.mrf.mxu0
    %v92 = vadd.f32 %v68, %v91
    %93 = vdwg.mxu0
    %vm94 = vcmp.gt.f32.partialorder %v92, 0.0
    %v95 = vmul.f32 %v92, 0.01
    %v96 = vsel %vm94, %v92, %v95
    %s97 = smul.u32 0, 2
    %p98 = scmp.lt.s32.totalorder %s97, 1
    %s99 = scalar_select %p98, %s97, 1
    %s100 = sld [smem:[#allocation3 + %s99]]
    %v101 = vstv %s100
    %vm102 = vcmp.lt.s32.totalorder %v65, %v101
    %v103 = vsel %vm102, 1, 0
    %vm104 = vcmp.eq.s32.totalorder %v103, 1
    %v105 = vsel %vm104, %v96, 0.0
    %106 = vst.msk [vmem:[#allocation9] sm:$0xff] %vm70, %v105
    %s107 = scalar_lea.vmem [#allocation4], 8
    %v108 = vld [vmem:[%s107] sm:$0xff]
    %v110 = vsel %vm70, %v108, 0
    %112 = vmatpush.msra.mxu0 0.0
    %113 = vmatpush.msra.mxu0 0.0
    %114 = vmatpush.msra.mxu0 0.0
    %115 = vmatpush.msra.mxu0 0.0
    %116 = vmatpush.msra.mxu0 0.0
    %117 = vmatpush.msra.mxu0 0.0
    %118 = vmatpush.msra.mxu0 0.0
    %119 = vmatpush.msra.mxu0 0.0
    %120 = vmatpush.msra.mxu0 0.0
    %121 = vmatpush.msra.mxu0 0.0
    %122 = vmatpush.msra.mxu0 0.0
    %123 = vmatpush.msra.mxu0 0.0
    %124 = vmatpush.msra.mxu0 %v59
    %125 = vmatpush.msra.mxu0 %v58
    %126 = vmatpush.msra.mxu0 %v57
    %127 = vmatpush.msra.mxu0 %v56
    %128 = vmatmul.f32.gmra.mxu0 %v110
    %v129 = vpop.f32.mrf.mxu0
    %v130 = vadd.f32 %v68, %v129
    %131 = vdwg.mxu0
    %vm132 = vcmp.gt.f32.partialorder %v130, 0.0
    %v133 = vmul.f32 %v130, 0.01
    %v134 = vsel %vm132, %v130, %v133
    %s135 = sadd.s32 %s97, 1
    %p136 = scmp.lt.s32.totalorder %s135, 1
    %s137 = scalar_select %p136, %s135, 1
    %s138 = sld [smem:[#allocation3 + %s137]]
    %v139 = vstv %s138
    %vm140 = vcmp.lt.s32.totalorder %v65, %v139
    %v141 = vsel %vm140, 1, 0
    %vm142 = vcmp.eq.s32.totalorder %v141, 1
    %v143 = vsel %vm142, %v134, 0.0
    %s144 = scalar_lea.vmem [#allocation9], 8
    %145 = vst.msk [vmem:[%s144] sm:$0xff] %vm70, %v143
    // Predicated region
    $region22: #{shared_fc_forward.1} parent=1 // pred_check
      _
    $region23: #{shared_fc_forward.1} parent=1 // pred_check_branch
      %147 = sbr.rel (0) target = $region25
    $region24: #{shared_fc_forward.1} parent=1 // pred_region
      %149 = vsyncadd [#allocation6], 0
      %s150 = sshll.u32 [#allocation9], 4
      %s151 = int_to_ptr.vmem [resolvable:$true] %s150
      %s152 = sshll.u32 %s4, 4
      %s153 = int_to_ptr.hbm [resolvable:$true] %s152
      %158 = dma.vmem_to_hbm [thread:$0]  %s151, 256, %s153, [#allocation6], 128, 128, 8
    $region25: #{shared_fc_forward.1} parent=1 // pred_fallthru
      _
    // Predicated region
    $region26: #{shared_fc_forward.1} parent=1 // pred_check
      _
    $region27: #{shared_fc_forward.1} parent=1 // pred_check_branch
      %160 = sbr.rel (0) target = $region29
    $region28: #{shared_fc_forward.1} parent=1 // pred_region
      %162 = dma.done [#allocation6], 256
    $region29: #{shared_fc_forward.1} parent=1 // pred_fallthru
      _
    %163 = vsyncpa [#allocation5], 1
    %164 = vsyncpa [#allocation8], 1
    %165 = vsyncpa [#allocation6], 1

</llo_original>
